<compile_context>
chip_gen: v6e
topology: v6e:2x2x1
jax: 0.10.0
libtpu: 0.0.40
codegen_flags: <defaults>
</compile_context>

<pallas_src>
import jax
import jax.numpy as jnp
from jax.experimental import pallas as pl
from jax.experimental.pallas import tpu as pltpu


# ---------------------------------------------------------------------------
# 1) Batched concatenation kernel: prefix | ctx | suffix  (C_TILE classes/step)
# ---------------------------------------------------------------------------

def _make_concat_kernel(n_ctx: int, c_tile: int):
    def kernel(prefix_ref, ctx_ref, suffix_ref, out_ref):
        # prefix_ref : (c_tile, 1, D)
        # ctx_ref    : (n_ctx, D)        shared, same block every grid step
        # suffix_ref : (c_tile, suffix_len, D)
        # out_ref    : (c_tile, L, D)
        d = out_ref.shape[-1]
        out_ref[:, 0:1, :] = prefix_ref[...]
        # NOTE: seq offsets 1 and 1+n_ctx are not sublane(8)-aligned, so the
        # seam rows lower to masked stores; negligible next to the DMA cost
        # once tiles are large.
        out_ref[:, 1:1 + n_ctx, :] = jnp.broadcast_to(
            ctx_ref[...][None, :, :], (c_tile, n_ctx, d))
        out_ref[:, 1 + n_ctx:, :] = suffix_ref[...]

    return kernel


def _pick_c_tile(n_cls, total_len, ctx_dim, itemsize, vmem_budget_bytes=16 << 20):
    # Per class: (prefix + suffix ~= L rows) in + (L rows) out, double-buffered.
    per_class = 2 * 2 * total_len * ctx_dim * itemsize
    c = max(1, vmem_budget_bytes // per_class)
    return int(min(c, n_cls, 128))


def prompt_learner_forward(ctx, token_prefix, token_suffix, c_tile=None):
    """Pallas equivalent of PromptLearner.forward() ('end' position, no batch).

    Args:
      ctx:          (n_ctx, ctx_dim)
      token_prefix: (n_cls, 1, ctx_dim)
      token_suffix: (n_cls, suffix_len, ctx_dim)
    Returns:
      prompts:      (n_cls, 1 + n_ctx + suffix_len, ctx_dim)
    """
    n_ctx, ctx_dim = ctx.shape
    n_cls = token_prefix.shape[0]
    suffix_len = token_suffix.shape[1]
    total_len = 1 + n_ctx + suffix_len

    # Promote everything to one dtype (e.g. bf16 embeddings + fp32 ctx).
    dtype = jnp.result_type(ctx.dtype, token_prefix.dtype, token_suffix.dtype)
    itemsize = jnp.dtype(dtype).itemsize
    ctx = ctx.astype(dtype)
    token_prefix = token_prefix.astype(dtype)
    token_suffix = token_suffix.astype(dtype)

    if c_tile is None:
        c_tile = _pick_c_tile(n_cls, total_len, ctx_dim, itemsize)
    c_tile = max(1, min(int(c_tile), n_cls))

    # Tail handling: pad the class axis to a multiple of c_tile, slice after.
    num_tiles = -(-n_cls // c_tile)
    n_cls_pad = num_tiles * c_tile
    if n_cls_pad != n_cls:
        pad = n_cls_pad - n_cls
        token_prefix = jnp.pad(token_prefix, ((0, pad), (0, 0), (0, 0)))
        token_suffix = jnp.pad(token_suffix, ((0, pad), (0, 0), (0, 0)))

    bytes_accessed = (
        (n_cls_pad * (1 + suffix_len)      # read prefix + suffix
         + n_ctx                           # read ctx
         + n_cls_pad * total_len)          # write prompts
        * ctx_dim * itemsize)

    kernel = _make_concat_kernel(n_ctx, c_tile)
    out = pl.pallas_call(
        kernel,
        out_shape=jax.ShapeDtypeStruct((n_cls_pad, total_len, ctx_dim), dtype),
        grid_spec=pltpu.PrefetchScalarGridSpec(
            num_scalar_prefetch=0,
            grid=(num_tiles,),
            in_specs=[
                pl.BlockSpec((c_tile, 1, ctx_dim), lambda i: (i, 0, 0)),
                pl.BlockSpec((n_ctx, ctx_dim), lambda i: (0, 0)),
                pl.BlockSpec((c_tile, suffix_len, ctx_dim), lambda i: (i, 0, 0)),
            ],
            out_specs=pl.BlockSpec((c_tile, total_len, ctx_dim),
                                   lambda i: (i, 0, 0)),
        ),
        compiler_params=pltpu.CompilerParams(
            dimension_semantics=("parallel",)),   # shards class tiles over v7x's 2 TCs
        cost_estimate=pl.CostEstimate(
            flops=0, transcendentals=0, bytes_accessed=bytes_accessed),
    )(token_prefix, ctx, token_suffix)

    return out[:n_cls] if n_cls_pad != n_cls else out


# ---------------------------------------------------------------------------
# 2) Aliased in-place variant: alias the full token embedding to the output
#    and DMA-scatter only the ctx rows (rows [1, 1+n_ctx) of every class).
# ---------------------------------------------------------------------------

def _make_ctx_scatter_kernel(n_ctx: int, n_cls: int, c_tile: int):
    def kernel(ctx_ref, emb_hbm_ref, out_hbm_ref, sems):
        # ctx_ref     : (n_ctx, D) in VMEM (same block every grid step)
        # emb_hbm_ref : (n_cls, L, D) in HBM -- same buffer as out (aliased)
        # out_hbm_ref : (n_cls, L, D) in HBM
        # sems        : DMA semaphores, one per in-flight class copy
        del emb_hbm_ref  # aliased with out_hbm_ref; prefix/suffix pass through
        t = pl.program_id(0)
        c0 = t * c_tile

        # Issue up to c_tile independent (n_ctx, D) DMAs, then wait for all.
        # Static unroll keeps the LLO scheduler's view simple; pl.when guards
        # the tail tile so we never write past n_cls classes.
        for i in range(c_tile):
            @pl.when(c0 + i < n_cls)
            def _start():
                pltpu.make_async_copy(
                    ctx_ref,
                    out_hbm_ref.at[c0 + i, pl.ds(1, n_ctx), :],
                    sems.at[i],
                ).start()

        for i in range(c_tile):
            @pl.when(c0 + i < n_cls)
            def _wait():
                pltpu.make_async_copy(
                    ctx_ref,
                    out_hbm_ref.at[c0 + i, pl.ds(1, n_ctx), :],
                    sems.at[i],
                ).wait()

    return kernel


def prompt_learner_forward_inplace(ctx, token_embedding, c_tile=8):
    """Same forward semantics, but takes the full token embedding (n_cls, L, D)
    (token_prefix == embedding[:, :1], token_suffix == embedding[:, 1+n_ctx:])
    and only writes the ctx rows; everything else passes through via aliasing.
    """
    n_ctx, ctx_dim = ctx.shape
    n_cls, total_len, emb_dim = token_embedding.shape
    assert emb_dim == ctx_dim, "ctx_dim mismatch between ctx and embedding"
    dtype = token_embedding.dtype
    ctx = ctx.astype(dtype)
    itemsize = jnp.dtype(dtype).itemsize

    c_tile = max(1, min(int(c_tile), n_cls))
    num_tiles = -(-n_cls // c_tile)

    # Only the ctx rows move: read ctx once, write n_cls copies of it.
    bytes_accessed = (n_cls * n_ctx + n_ctx) * ctx_dim * itemsize

    kernel = _make_ctx_scatter_kernel(n_ctx, n_cls, c_tile)
    return pl.pallas_call(
        kernel,
        out_shape=jax.ShapeDtypeStruct((n_cls, total_len, ctx_dim), dtype),
        grid_spec=pltpu.PrefetchScalarGridSpec(
            num_scalar_prefetch=0,
            grid=(num_tiles,),
            in_specs=[
                pl.BlockSpec((n_ctx, ctx_dim), lambda t: (0, 0)),
                pl.BlockSpec(memory_space=pl.ANY),   # embedding stays in HBM
            ],
            out_specs=pl.BlockSpec(memory_space=pl.ANY),
            scratch_shapes=[pltpu.SemaphoreType.DMA((c_tile,))],
        ),
        input_output_aliases={1: 0},                 # embedding buffer -> output
        compiler_params=pltpu.CompilerParams(
            dimension_semantics=("parallel",)),
        cost_estimate=pl.CostEstimate(
            flops=0, transcendentals=0, bytes_accessed=bytes_accessed),
    )(ctx, token_embedding)


if __name__ == "__main__":
    # Small, deterministic synthetic setup (mirrors __init__ shapes).
    # n_cls=5 with c_tile=4 exercises the tail-tile handling of both kernels.
    n_cls = 5
    n_ctx = 8
    ctx_dim = 128      # ln_final.weight.shape[0] (lane-aligned)
    total_len = 24     # tokenized prompt length (77 in real CLIP, small here)
    suffix_len = total_len - 1 - n_ctx
    dtype = jnp.float32

    key = jax.random.PRNGKey(0)
    k_ctx, k_emb = jax.random.split(key, 2)

    # nn.init.normal_(ctx_vectors, std=0.02)
    ctx = (0.02 * jax.random.normal(k_ctx, (n_ctx, ctx_dim))).astype(dtype)

    # Synthetic token_embedding(tokenized_prompts): (n_cls, total_len, ctx_dim)
    embedding = jax.random.normal(k_emb, (n_cls, total_len, ctx_dim)).astype(dtype)
    token_prefix = embedding[:, :1, :]                 # (n_cls, 1, D)
    token_suffix = embedding[:, 1 + n_ctx:, :]         # (n_cls, suffix_len, D)

    # text_feature_bias parameter exists in the module but is unused in forward.

    # Reference (plain JAX) concatenation semantics.
    ctx_b = jnp.broadcast_to(ctx[None, :, :], (n_cls, n_ctx, ctx_dim))
    ref = jnp.concatenate([token_prefix, ctx_b, token_suffix], axis=-2)

    prompts_a = prompt_learner_forward(ctx, token_prefix, token_suffix, c_tile=4)
    prompts_b = prompt_learner_forward_inplace(ctx, embedding, c_tile=4)
    prompts_a = jax.block_until_ready(prompts_a)
    prompts_b = jax.block_until_ready(prompts_b)

    assert prompts_a.shape == (n_cls, total_len, ctx_dim)
    assert prompts_b.shape == (n_cls, total_len, ctx_dim)
    assert bool(jnp.array_equal(prompts_a, ref)), "batched concat kernel mismatch"
    assert bool(jnp.array_equal(prompts_b, ref)), "aliased in-place kernel mismatch"

    print("KERNEL_OK")
</pallas_src>

<mosaic_0001>
module attributes {stable_mosaic.version = 11 : i64} {
  func.func @kernel(%arg0: i32, %arg1: memref<4x1x128xf32, #tpu.memory_space<vmem>>, %arg2: memref<8x128xf32, #tpu.memory_space<vmem>>, %arg3: memref<4x15x128xf32, #tpu.memory_space<vmem>>, %arg4: memref<4x24x128xf32, #tpu.memory_space<vmem>>) attributes {dimension_semantics = [#tpu.dimension_semantics<parallel>], iteration_bounds = array<i64: 2>, scalar_prefetch = 0 : i64, scratch_operands = 0 : i64, tpu.core_type = #tpu.core_type<tc>, window_params = [{transform_indices = @transform_0, window_bounds = array<i64: 4, 1, 128>}, {pipeline_mode = #tpu.pipeline_mode<synchronous>, transform_indices = @transform_1, window_bounds = array<i64: 8, 128>}, {transform_indices = @transform_2, window_bounds = array<i64: 4, 15, 128>}, {transform_indices = @transform_3, window_bounds = array<i64: 4, 24, 128>}]} {
    %c0 = arith.constant 0 : index
    %c0_0 = arith.constant 0 : index
    %c0_1 = arith.constant 0 : index
    %0 = vector.load %arg1[%c0, %c0_0, %c0_1] : memref<4x1x128xf32, #tpu.memory_space<vmem>>, vector<4x1x128xf32>
    %c0_2 = arith.constant 0 : index
    %c0_3 = arith.constant 0 : index
    %c0_4 = arith.constant 0 : index
    %1 = vector.load %arg4[%c0_2, %c0_3, %c0_4] : memref<4x24x128xf32, #tpu.memory_space<vmem>>, vector<4x1x128xf32>
    tpu.vector_store %arg4[%c0_2, %c0_3, %c0_4], %0 {strides = array<i32>} : memref<4x24x128xf32, #tpu.memory_space<vmem>>, vector<4x1x128xf32>,
    %c0_5 = arith.constant 0 : index
    %c0_6 = arith.constant 0 : index
    %2 = vector.load %arg2[%c0_5, %c0_6] : memref<8x128xf32, #tpu.memory_space<vmem>>, vector<8x128xf32>
    %3 = vector.shape_cast %2 : vector<8x128xf32> to vector<1x8x128xf32>
    %4 = vector.shape_cast %3 : vector<1x8x128xf32> to vector<1x8x128xf32>
    %5 = vector.broadcast %4 : vector<1x8x128xf32> to vector<4x8x128xf32>
    %c0_7 = arith.constant 0 : index
    %c1 = arith.constant 1 : index
    %c0_8 = arith.constant 0 : index
    %6 = vector.load %arg4[%c0_7, %c1, %c0_8] : memref<4x24x128xf32, #tpu.memory_space<vmem>>, vector<4x8x128xf32>
    tpu.vector_store %arg4[%c0_7, %c1, %c0_8], %5 {strides = array<i32>} : memref<4x24x128xf32, #tpu.memory_space<vmem>>, vector<4x8x128xf32>,
    %c0_9 = arith.constant 0 : index
    %c0_10 = arith.constant 0 : index
    %c0_11 = arith.constant 0 : index
    %7 = vector.load %arg3[%c0_9, %c0_10, %c0_11] : memref<4x15x128xf32, #tpu.memory_space<vmem>>, vector<4x15x128xf32>
    %c0_12 = arith.constant 0 : index
    %c9 = arith.constant 9 : index
    %c0_13 = arith.constant 0 : index
    %8 = vector.load %arg4[%c0_12, %c9, %c0_13] : memref<4x24x128xf32, #tpu.memory_space<vmem>>, vector<4x15x128xf32>
    tpu.vector_store %arg4[%c0_12, %c9, %c0_13], %7 {strides = array<i32>} : memref<4x24x128xf32, #tpu.memory_space<vmem>>, vector<4x15x128xf32>,
    return
  }
  func.func @transform_0(%arg0: i32) -> (i32, i32, i32) {
    %c0_i32 = arith.constant 0 : i32
    %c0_i32_0 = arith.constant 0 : i32
    %c0_i32_1 = arith.constant 0 : i32
    return %arg0, %c0_i32, %c0_i32_0 : i32, i32, i32
  }
  func.func @transform_1(%arg0: i32) -> (i32, i32) {
    %c0_i32 = arith.constant 0 : i32
    %c0_i32_0 = arith.constant 0 : i32
    %c0_i32_1 = arith.constant 0 : i32
    return %c0_i32, %c0_i32_0 : i32, i32
  }
  func.func @transform_2(%arg0: i32) -> (i32, i32, i32) {
    %c0_i32 = arith.constant 0 : i32
    %c0_i32_0 = arith.constant 0 : i32
    %c0_i32_1 = arith.constant 0 : i32
    return %arg0, %c0_i32, %c0_i32_0 : i32, i32, i32
  }
  func.func @transform_3(%arg0: i32) -> (i32, i32, i32) {
    %c0_i32 = arith.constant 0 : i32
    %c0_i32_0 = arith.constant 0 : i32
    %c0_i32_1 = arith.constant 0 : i32
    return %arg0, %c0_i32, %c0_i32_0 : i32, i32, i32
  }
}

</mosaic_0001>

<llo_original>
// kernel: tpu_custom_call.1
$region0: #{tpu_custom_call.1}
  #allocation0 [shape = 'u32[]', space=smem, size = 0x4, offset = 0x4, fixed_abs, tag = 'smem constant byte address 0x4 - core index']
  #allocation1 [shape = 'u32[144,128]{1,0:T(1,128)}', space=vmem, size = 0x12000, scoped, tag = 'internal scratch']
  %s0 = inlined_call_operand.vmem [shape: f32[8,1,128], index: 0, kind: input, shape index: {}]
  %s1 = inlined_call_operand.vmem [shape: f32[8,128], index: 1, kind: input, shape index: {}]
  %s2 = inlined_call_operand.vmem [shape: f32[8,15,128], index: 2, kind: input, shape index: {}]
  %s3 = inlined_call_operand.hbm [shape: f32[8,24,128], index: 3, kind: output, shape index: {}]
  %s4 = sld [smem:[#allocation0]]
  $region45: #{tpu_custom_call.1} parent=0
    _
  %s6 = ssub.s32 1, %s4
  %s7 = scalar_select 0, %s6, %s4
  $region1: #{tpu_custom_call.1} parent=0
    #allocation2 [shape = 'u8[98304]{0}', space=vmem, size = 0x18000, scoped, tag = 'output window, operand 0']
    #allocation3 [shape = 's32[2]{0}', space=sflag, size = 0x8, scoped, tag = 'scoped memory for tpu_custom_call.1']
    %8 = vsyncpa [#allocation3], 0
    %s9 = scalar_lea.sflag [#allocation3], 1
    %10 = vsyncpa %s9, 0
    loop: start=0, step=1, limit=4
    $region2: #{tpu_custom_call.1} parent=1 // loop_pre_header
      _
    $region3: #{tpu_custom_call.1} parent=1 // loop_header
      %s12 = sphi 0, %s16
      %p13 = scmp.ge.s32.totalorder %s12, 4
      %s22 = sphi 0, %s24
      %s25 = sphi 0, %s22
      %s26 = sphi 0, %s25
      %s42 = sphi 0, %s26
      %s46 = sphi 0, %s46
      %s48 = sphi 0, %s46
      %s49 = sphi 0, %s48
      %s63 = sphi 0, %s49
      %s69 = sphi 0, %s71
      %s72 = sphi 0, %s69
      %s73 = sphi 0, %s72
      %s89 = sphi 0, %s73
      %s95 = sphi 0, %s97
      %s98 = sphi 0, %s95
      %s99 = sphi 0, %s98
      %s115 = sphi 0, %s99
    $region4: #{tpu_custom_call.1} parent=1 // loop_header_branch
      %15 = sbr.rel (%p13) target = $region8
    $region5: #{tpu_custom_call.1} parent=1 // loop_body
      %s17 = ssub.s32 %s12, 1
      %s18 = ssub.s32 %s12, 2
      %s19 = sadd.s32 %s12, 1
      %s20 = ssub.s32 %s12, %s19
      %p21 = scmp.eq.s32.totalorder %s20, 0
      %s23 = sadd.s32 %s22, 1
      %s24 = scalar_select %p21, %s22, %s23
      %p27 = pneg %p21
      %p28 = scmp.eq.s32.totalorder %s12, 1
      %p29 = por %p27, %p28
      %p30 = scmp.ne.s32.totalorder %s22, %s25
      %p31 = scmp.eq.s32.totalorder %s12, 0
      %p32 = por %p30, %p31
      %p33 = scmp.ne.s32.totalorder %s22, %s25
      %p34 = scmp.eq.s32.totalorder %s17, 1
      %p35 = por %p33, %p34
      %p36 = scmp.ne.s32.totalorder %s25, %s26
      %p37 = scmp.eq.s32.totalorder %s17, 0
      %p38 = por %p36, %p37
      %p39 = scmp.ne.s32.totalorder %s25, %s26
      %p40 = scmp.eq.s32.totalorder %s18, 1
      %p41 = por %p39, %p40
      %p43 = scmp.ne.s32.totalorder %s26, %s42
      %p44 = scmp.eq.s32.totalorder %s18, 0
      %p45 = por %p43, %p44
      %s47 = sadd.s32 %s46, 1
      %p50 = scmp.eq.s32.totalorder %s12, 1
      %p51 = scmp.ne.s32.totalorder %s46, %s48
      %p52 = scmp.eq.s32.totalorder %s12, 0
      %p53 = por %p51, %p52
      %p54 = scmp.ne.s32.totalorder %s46, %s48
      %p55 = scmp.eq.s32.totalorder %s17, 1
      %p56 = por %p54, %p55
      %p57 = scmp.ne.s32.totalorder %s48, %s49
      %p58 = scmp.eq.s32.totalorder %s17, 0
      %p59 = por %p57, %p58
      %p60 = scmp.ne.s32.totalorder %s48, %s49
      %p61 = scmp.eq.s32.totalorder %s18, 1
      %p62 = por %p60, %p61
      %p64 = scmp.ne.s32.totalorder %s49, %s63
      %p65 = scmp.eq.s32.totalorder %s18, 0
      %p66 = por %p64, %p65
      %s67 = ssub.s32 %s12, %s19
      %p68 = scmp.eq.s32.totalorder %s67, 0
      %s70 = sadd.s32 %s69, 1
      %s71 = scalar_select %p68, %s69, %s70
      %p74 = pneg %p68
      %p75 = scmp.eq.s32.totalorder %s12, 1
      %p76 = por %p74, %p75
      %p77 = scmp.ne.s32.totalorder %s69, %s72
      %p78 = scmp.eq.s32.totalorder %s12, 0
      %p79 = por %p77, %p78
      %p80 = scmp.ne.s32.totalorder %s69, %s72
      %p81 = scmp.eq.s32.totalorder %s17, 1
      %p82 = por %p80, %p81
      %p83 = scmp.ne.s32.totalorder %s72, %s73
      %p84 = scmp.eq.s32.totalorder %s17, 0
      %p85 = por %p83, %p84
      %p86 = scmp.ne.s32.totalorder %s72, %s73
      %p87 = scmp.eq.s32.totalorder %s18, 1
      %p88 = por %p86, %p87
      %p90 = scmp.ne.s32.totalorder %s73, %s89
      %p91 = scmp.eq.s32.totalorder %s18, 0
      %p92 = por %p90, %p91
      %s93 = ssub.s32 %s12, %s19
      %p94 = scmp.eq.s32.totalorder %s93, 0
      %s96 = sadd.s32 %s95, 1
      %s97 = scalar_select %p94, %s95, %s96
      %p100 = pneg %p94
      %p101 = scmp.eq.s32.totalorder %s12, 1
      %p102 = por %p100, %p101
      %p103 = scmp.ne.s32.totalorder %s95, %s98
      %p104 = scmp.eq.s32.totalorder %s12, 0
      %p105 = por %p103, %p104
      %p106 = scmp.ne.s32.totalorder %s95, %s98
      %p107 = scmp.eq.s32.totalorder %s17, 1
      %p108 = por %p106, %p107
      %p109 = scmp.ne.s32.totalorder %s98, %s99
      %p110 = scmp.eq.s32.totalorder %s17, 0
      %p111 = por %p109, %p110
      %p112 = scmp.ne.s32.totalorder %s98, %s99
      %p113 = scmp.eq.s32.totalorder %s18, 1
      %p114 = por %p112, %p113
      %p116 = scmp.ne.s32.totalorder %s99, %s115
      %p117 = scmp.eq.s32.totalorder %s18, 0
      %p118 = por %p116, %p117
      %p119 = scmp.le.s32.totalorder 1, %s12
      %p120 = scmp.lt.s32.totalorder %s12, 3
      %p121 = pnand %p119, %p120
      %p122 = pneg %p121
      // Predicated region
      $region9: #{tpu_custom_call.1} parent=5 // pred_check
        _
      $region10: #{tpu_custom_call.1} parent=5 // pred_check_branch
        %124 = sbr.rel (%p121) target = $region12
      $region11: #{tpu_custom_call.1} parent=5 // pred_region
        %s125 = ssub.s32 %s12, 1
        // Predicated region
        $region13: #{tpu_custom_call.1} parent=11 // pred_check
          %p126 = pneg %p59
        $region14: #{tpu_custom_call.1} parent=11 // pred_check_branch
          %128 = sbr.rel (%p126) target = $region16
        $region15: #{tpu_custom_call.1} parent=11 // pred_region
          _
        $region16: #{tpu_custom_call.1} parent=11 // pred_fallthru
          _
      $region12: #{tpu_custom_call.1} parent=5 // pred_fallthru
        _
      %p129 = scmp.lt.s32.totalorder %s12, 2
      // Predicated region
      $region17: #{tpu_custom_call.1} parent=5 // pred_check
        %p130 = pneg %p129
      $region18: #{tpu_custom_call.1} parent=5 // pred_check_branch
        %132 = sbr.rel (%p130) target = $region20
      $region19: #{tpu_custom_call.1} parent=5 // pred_region
        // Predicated region
        $region21: #{tpu_custom_call.1} parent=19 // pred_check
          %p133 = pneg %p32
        $region22: #{tpu_custom_call.1} parent=19 // pred_check_branch
          %135 = sbr.rel (%p133) target = $region24
        $region23: #{tpu_custom_call.1} parent=19 // pred_region
          %s136 = smul.u32 4, %s12
          %p137 = scmp.lt.s32.totalorder %s136, 7
          %s138 = scalar_select %p137, %s136, 7
          %s139 = scalar_lea.vmem %s0, %s138
          %s140 = smul.u32 4, %s12
        $region24: #{tpu_custom_call.1} parent=19 // pred_fallthru
          _
        // Predicated region
        $region25: #{tpu_custom_call.1} parent=19 // pred_check
          %p141 = pneg %p79
        $region26: #{tpu_custom_call.1} parent=19 // pred_check_branch
          %143 = sbr.rel (%p141) target = $region28
        $region27: #{tpu_custom_call.1} parent=19 // pred_region
          %s144 = smul.u32 4, %s12
          %p145 = scmp.lt.s32.totalorder %s144, 7
          %s146 = scalar_select %p145, %s144, 7
          %s147 = smul.addr %s146, 2
          %s148 = smul.addr %s147, 8
          %s149 = scalar_lea.vmem %s2, %s148
          %s150 = smul.u32 4, %s12
        $region28: #{tpu_custom_call.1} parent=19 // pred_fallthru
          _
      $region20: #{tpu_custom_call.1} parent=5 // pred_fallthru
        _
      %p151 = scmp.le.s32.totalorder 1, %s12
      %p152 = scmp.lt.s32.totalorder %s12, 3
      %p153 = pnand %p151, %p152
      %p154 = pneg %p153
      // Predicated region
      $region29: #{tpu_custom_call.1} parent=5 // pred_check
        _
      $region30: #{tpu_custom_call.1} parent=5 // pred_check_branch
        %156 = sbr.rel (%p153) target = $region32
      $region31: #{tpu_custom_call.1} parent=5 // pred_region
        %s157 = ssub.s32 %s12, 1
        %s158 = smul.u32 4, %s17
        %p159 = scmp.lt.s32.totalorder %s158, 7
        %s160 = scalar_select %p159, %s158, 7
        %s161 = scalar_lea.vmem %s0, %s160
        %p162 = pneg %p38
        %p163 = pneg %p35
        %p164 = pneg %p59
        %p165 = pneg %p56
        %s166 = smul.u32 4, %s17
        %p167 = scmp.lt.s32.totalorder %s166, 7
        %s168 = scalar_select %p167, %s166, 7
        %s169 = smul.addr %s168, 2
        %s170 = smul.addr %s169, 8
        %s171 = scalar_lea.vmem %s2, %s170
        %p172 = pneg %p85
        %p173 = pneg %p82
        %p174 = pneg %p111
        %p175 = pneg %p108
        %s176 = sand.u32 %s98, 1
        %s177 = scalar_lea.sflag [#allocation3], %s176
        %s178 = sand.u32 %s98, 1
        %s179 = smul.addr %s178, 96
        %s180 = scalar_lea.vmem [#allocation2], %s179
        %s181 = smul.u32 4, %s17
        %p182 = scmp.lt.s32.totalorder %s181, 7
        %s183 = scalar_select %p182, %s181, 7
        %s184 = scalar_lea.vmem %s0, %s183
        %s185 = smul.u32 4, %s17
        %s186 = smul.u32 4, %s17
        %p187 = scmp.lt.s32.totalorder %s186, 7
        %s188 = scalar_select %p187, %s186, 7
        %s189 = smul.addr %s188, 2
        %s190 = smul.addr %s189, 8
        %s191 = scalar_lea.vmem %s2, %s190
        %s192 = smul.u32 4, %s17
        %s193 = smul.u32 4, %s17
        %v194 = vld [vmem:[%s184] sm:$0x1]
        %v195 = vld [vmem:[%s184 + $0x1] sm:$0x1]
        %v196 = vld [vmem:[%s184 + $0x2] sm:$0x1]
        %v197 = vld [vmem:[%s184 + $0x3] sm:$0x1]
        %198 = vst [vmem:[%s180] sm:$0x1] %v194
        %199 = vst [vmem:[%s180 + $0x18] sm:$0x1] %v195
        %200 = vst [vmem:[%s180 + $0x30] sm:$0x1] %v196
        %201 = vst [vmem:[%s180 + $0x48] sm:$0x1] %v197
        %v202 = vld [vmem:[%s1] sm:$0xff]
        %203 = vst [vmem:[%s180 + $0x1] sm:$0xff] %v202
        %204 = vst [vmem:[%s180 + $0x19] sm:$0xff] %v202
        %205 = vst [vmem:[%s180 + $0x31] sm:$0xff] %v202
        %206 = vst [vmem:[%s180 + $0x49] sm:$0xff] %v202
        %v207 = vld [vmem:[%s191] sm:$0xff]
        %v208 = vld [vmem:[%s191 + $0x8] sm:$0x7f]
        %v209 = vld [vmem:[%s191 + $0x10] sm:$0xff]
        %v210 = vld [vmem:[%s191 + $0x18] sm:$0x7f]
        %v211 = vld [vmem:[%s191 + $0x20] sm:$0xff]
        %v212 = vld [vmem:[%s191 + $0x28] sm:$0x7f]
        %v213 = vld [vmem:[%s191 + $0x30] sm:$0xff]
        %v214 = vld [vmem:[%s191 + $0x38] sm:$0x7f]
        %215 = vst [vmem:[%s180 + $0x9] sm:$0xff] %v207
        %216 = vst [vmem:[%s180 + $0x11] sm:$0x7f] %v208
        %217 = vst [vmem:[%s180 + $0x21] sm:$0xff] %v209
        %218 = vst [vmem:[%s180 + $0x29] sm:$0x7f] %v210
        %219 = vst [vmem:[%s180 + $0x39] sm:$0xff] %v211
        %220 = vst [vmem:[%s180 + $0x41] sm:$0x7f] %v212
        %221 = vst [vmem:[%s180 + $0x51] sm:$0xff] %v213
        %222 = vst [vmem:[%s180 + $0x59] sm:$0x7f] %v214
        %s223 = sand.u32 %s98, 1
        %s224 = scalar_lea.sflag [#allocation3], %s223
        %s225 = sand.u32 %s98, 1
        %s226 = smul.addr %s225, 96
        %s227 = scalar_lea.vmem [#allocation2], %s226
        // Predicated region
        $region33: #{tpu_custom_call.1} parent=31 // pred_check
          %p228 = pneg %p108
        $region34: #{tpu_custom_call.1} parent=31 // pred_check_branch
          %230 = sbr.rel (%p228) target = $region36
        $region35: #{tpu_custom_call.1} parent=31 // pred_region
          %s231 = smul.u32 4, %s17
          %s233 = ssub.s32 1536, 1536
          %234 = vsyncadd %s224, %s233
          %s235 = smul.addr %s231, 3
          %s236 = smul.addr %s235, 128
          %s237 = scalar_lea.hbm %s3, %s236
          %s238 = sshll.u32 %s227, 4
          %s239 = int_to_ptr.vmem [resolvable:$true] %s238
          %244 = dma.vmem_to_hbm [thread:$0]  %s239, 1536, %s237, %s224, 128, 128, 8
        $region36: #{tpu_custom_call.1} parent=31 // pred_fallthru
          _
      $region32: #{tpu_custom_call.1} parent=5 // pred_fallthru
        _
      %p245 = scmp.le.s32.totalorder 2, %s12
      // Predicated region
      $region37: #{tpu_custom_call.1} parent=5 // pred_check
        %p246 = pneg %p245
      $region38: #{tpu_custom_call.1} parent=5 // pred_check_branch
        %248 = sbr.rel (%p246) target = $region40
      $region39: #{tpu_custom_call.1} parent=5 // pred_region
        %s249 = ssub.s32 %s12, 2
        // Predicated region
        $region41: #{tpu_custom_call.1} parent=39 // pred_check
          %p250 = pneg %p114
        $region42: #{tpu_custom_call.1} parent=39 // pred_check_branch
          %252 = sbr.rel (%p250) target = $region44
        $region43: #{tpu_custom_call.1} parent=39 // pred_region
          %s253 = sand.u32 %s99, 1
          %s254 = scalar_lea.sflag [#allocation3], %s253
          %s255 = sand.u32 %s99, 1
          %s256 = smul.addr %s255, 96
          %s257 = scalar_lea.vmem [#allocation2], %s256
          %258 = dma.done %s254, 1536
        $region44: #{tpu_custom_call.1} parent=39 // pred_fallthru
          _
      $region40: #{tpu_custom_call.1} parent=5 // pred_fallthru
        _
    $region6: #{tpu_custom_call.1} parent=1 // loop_footer
      %s16 = sadd.s32 1, %s12
    $region7: #{tpu_custom_call.1} parent=1 // loop_footer_branch
      %11 = sbr.rel target = $region3
    $region8: #{tpu_custom_call.1} parent=1 // loop_exit
      _
    %259 = vsyncpa [#allocation3], 1
    %s260 = scalar_lea.sflag [#allocation3], 1
    %261 = vsyncpa %s260, 1

</llo_original>
